<compile_context>
chip_gen: v7x
topology: tpu7x:2x2x1
jax: 0.10.0
libtpu: 0.0.40
codegen_flags: <defaults>
</compile_context>

<pallas_src>
import functools

import jax
import jax.numpy as jnp
import numpy as np
from jax.experimental import pallas as pl
from jax.experimental.pallas import tpu as pltpu


def _disc_kernel(x_ref, s_ref, w_ref, sel_ref, o_ref):
    # h = summary @ W_blockdiag   (MXU, f32 accumulation)
    h = jnp.dot(s_ref[...], w_ref[...], preferred_element_type=jnp.float32)
    # elementwise product in f32 (VPU)
    prod = x_ref[...].astype(jnp.float32) * h
    # segmented sum over each H-lane group via an MXU matmul with a 0/1
    # selector -> (bm, pack).  Avoids XLU cross-lane reduce + relayout.
    o_ref[...] = jnp.dot(prod, sel_ref[...], preferred_element_type=jnp.float32)


def _round_up(a, b):
    return (a + b - 1) // b * b


def _padded_tile_bytes(rows, cols, itemsize):
    # VMEM (8,128)-tiled footprint of a (rows, cols) buffer.
    return _round_up(max(rows, 1), 8) * _round_up(max(cols, 1), 128) * itemsize


@functools.partial(jax.jit, static_argnames=("tile_m",))
def discriminator_forward(x, summary, weight, *, tile_m=8192):
    """Pallas equivalent of Discriminator.forward(x, summary) -> (N,) f32."""
    N, H = x.shape
    assert summary.shape == (N, H)
    assert weight.shape == (H, H)

    # ---- lane packing factor ------------------------------------------------
    pack = 1
    for p in (4, 2):
        if N % p == 0 and p * H <= 128:
            pack = p
            break
    Hp = pack * H
    Np = N // pack

    # Free reshapes of contiguous arrays: (N, H) -> (Np, Hp); row r, lane g*H+j
    # holds logical element (pack*r + g, j).
    x_p = x.reshape(Np, Hp)
    s_p = summary.reshape(Np, Hp)

    # Block-diagonal weight kron(I_pack, W) and the 0/1 segment-sum selector.
    w_p = jnp.kron(jnp.eye(pack, dtype=weight.dtype), weight)            # (Hp, Hp)
    sel = jnp.kron(jnp.eye(pack, dtype=jnp.float32),
                   jnp.ones((H, 1), dtype=jnp.float32))                  # (Hp, pack)

    # ---- row-tile size (packed rows per grid step) ---------------------------
    target = max(128, _round_up(max(tile_m // pack, 1), 128))

    # Cap by a VMEM budget computed with lane-padded (minor -> 128) sizes.
    per_row = (2 * _round_up(Hp, 128) * x.dtype.itemsize           # x double buffer
               + 2 * _round_up(Hp, 128) * summary.dtype.itemsize   # summary dbl buffer
               + 2 * _round_up(pack, 128) * 4)                     # out double buffer
    fixed = (2 * _padded_tile_bytes(Hp, Hp, weight.dtype.itemsize)
             + 2 * _padded_tile_bytes(Hp, pack, 4))
    budget = 24 * 1024 * 1024
    cap = max(128, ((budget - fixed) // per_row) // 128 * 128)
    target = min(target, cap)

    if Np <= 256:
        # Tiny problem: one exact block (block dim == full array dim is legal
        # even when not a multiple of 8).
        bm = Np
    elif Np <= target:
        # Mid-size: >= 2 balanced tiles so the parallel axis uses both
        # TensorCores on v7x.
        bm = min(_round_up(pl.cdiv(Np, 2), 128), target)
    else:
        bm = target
    num_tiles = pl.cdiv(Np, bm)

    needed = per_row * _round_up(bm, 8) + fixed
    vmem_limit = int(min(max(2 * needed, 8 * 1024 * 1024), 32 * 1024 * 1024))

    out = pl.pallas_call(
        _disc_kernel,
        out_shape=jax.ShapeDtypeStruct((Np, pack), jnp.float32),
        grid=(num_tiles,),
        in_specs=[
            pl.BlockSpec((bm, Hp), lambda i: (i, 0)),    # x tile (packed rows)
            pl.BlockSpec((bm, Hp), lambda i: (i, 0)),    # summary tile
            pl.BlockSpec((Hp, Hp), lambda i: (0, 0)),    # block-diag W, VMEM resident
            pl.BlockSpec((Hp, pack), lambda i: (0, 0)),  # selector, VMEM resident
        ],
        out_specs=pl.BlockSpec((bm, pack), lambda i: (i, 0)),
        compiler_params=pltpu.CompilerParams(
            dimension_semantics=("parallel",),
            vmem_limit_bytes=vmem_limit,
        ),
    )(x_p, s_p, w_p, sel)

    # (Np, pack) row-major -> (N,): element (r, g) is logical row pack*r + g.
    return out.reshape(N)


def init_weight(key, hidden_dim):
    # torch_geometric-style `uniform(size, tensor)`:
    #   bound = 1 / sqrt(size); tensor.uniform_(-bound, bound)
    bound = 1.0 / np.sqrt(hidden_dim)
    return jax.random.uniform(
        key, (hidden_dim, hidden_dim), dtype=jnp.float32,
        minval=-bound, maxval=bound,
    )


if __name__ == "__main__":
    hidden_dim = 32
    base_key = jax.random.PRNGKey(0)
    weight = init_weight(jax.random.fold_in(base_key, 7), hidden_dim)

    def reference(x, summary, weight):
        h = jnp.dot(summary.astype(jnp.float32), weight,
                    precision=jax.lax.Precision.HIGHEST)
        return jnp.sum(x.astype(jnp.float32) * h, axis=1)

    cases = [
        # (num_nodes, dtype, tile_m)
        (8,    jnp.float32,  8192),  # tiny: single packed block (pack=4)
        (1000, jnp.float32,  8192),  # single block, pack=4
        (777,  jnp.float32,  8192),  # odd N -> pack=1 fallback, 2 tiles, ragged tail
        (4096, jnp.float32,  1024),  # multi-tile packed grid, resident-W reuse
        (1000, jnp.bfloat16, 8192),  # bf16 activations, f32 accumulation
    ]

    for idx, (num_nodes, dtype, tile_m) in enumerate(cases):
        kx, ks = jax.random.split(jax.random.fold_in(base_key, idx), 2)
        x = jax.random.normal(kx, (num_nodes, hidden_dim), dtype=jnp.float32).astype(dtype)
        summary = jax.random.normal(ks, (num_nodes, hidden_dim), dtype=jnp.float32).astype(dtype)

        out = discriminator_forward(x, summary, weight, tile_m=tile_m)
        out = jax.block_until_ready(out)

        ref = reference(x, summary, weight)
        tol = 1e-4 if dtype == jnp.float32 else 5e-3
        np.testing.assert_allclose(np.asarray(out), np.asarray(ref),
                                   rtol=tol, atol=tol)

    print("KERNEL_OK")
</pallas_src>

<mosaic_0001>
module attributes {stable_mosaic.version = 11 : i64} {
  func.func @_disc_kernel(%arg0: i32, %arg1: memref<2x128xf32, #tpu.memory_space<vmem>>, %arg2: memref<2x128xf32, #tpu.memory_space<vmem>>, %arg3: memref<128x128xf32, #tpu.memory_space<vmem>>, %arg4: memref<128x4xf32, #tpu.memory_space<vmem>>, %arg5: memref<2x4xf32, #tpu.memory_space<vmem>>) attributes {dimension_semantics = [#tpu.dimension_semantics<parallel>], iteration_bounds = array<i64: 1>, scalar_prefetch = 0 : i64, scratch_operands = 0 : i64, tpu.core_type = #tpu.core_type<tc>, window_params = [{transform_indices = @transform_0, window_bounds = array<i64: 2, 128>}, {transform_indices = @transform_1, window_bounds = array<i64: 2, 128>}, {pipeline_mode = #tpu.pipeline_mode<synchronous>, transform_indices = @transform_2, window_bounds = array<i64: 128, 128>}, {pipeline_mode = #tpu.pipeline_mode<synchronous>, transform_indices = @transform_3, window_bounds = array<i64: 128, 4>}, {transform_indices = @transform_4, window_bounds = array<i64: 2, 4>}]} {
    %c0 = arith.constant 0 : index
    %c0_0 = arith.constant 0 : index
    %0 = vector.load %arg2[%c0, %c0_0] : memref<2x128xf32, #tpu.memory_space<vmem>>, vector<2x128xf32>
    %c0_1 = arith.constant 0 : index
    %c0_2 = arith.constant 0 : index
    %1 = vector.load %arg3[%c0_1, %c0_2] : memref<128x128xf32, #tpu.memory_space<vmem>>, vector<128x128xf32>
    %cst = arith.constant dense<0.000000e+00> : vector<2x128xf32>
    %2 = tpu.matmul %0, %1, %cst {dimension_numbers = #tpu.dot_dimension_numbers<[1], [0], [0], [1], [0, 0, 1, 1], [], []>} : vector<2x128xf32>, vector<128x128xf32>, vector<2x128xf32> -> vector<2x128xf32>
    %c0_3 = arith.constant 0 : index
    %c0_4 = arith.constant 0 : index
    %3 = vector.load %arg1[%c0_3, %c0_4] : memref<2x128xf32, #tpu.memory_space<vmem>>, vector<2x128xf32>
    %4 = arith.mulf %3, %2 : vector<2x128xf32>
    %c0_5 = arith.constant 0 : index
    %c0_6 = arith.constant 0 : index
    %5 = vector.load %arg4[%c0_5, %c0_6] : memref<128x4xf32, #tpu.memory_space<vmem>>, vector<128x4xf32>
    %cst_7 = arith.constant dense<0.000000e+00> : vector<2x4xf32>
    %6 = tpu.matmul %4, %5, %cst_7 {dimension_numbers = #tpu.dot_dimension_numbers<[1], [0], [0], [1], [0, 0, 1, 1], [], []>} : vector<2x128xf32>, vector<128x4xf32>, vector<2x4xf32> -> vector<2x4xf32>
    %c0_8 = arith.constant 0 : index
    %c0_9 = arith.constant 0 : index
    %7 = vector.load %arg5[%c0_8, %c0_9] : memref<2x4xf32, #tpu.memory_space<vmem>>, vector<2x4xf32>
    tpu.vector_store %arg5[%c0_8, %c0_9], %6 {strides = array<i32>} : memref<2x4xf32, #tpu.memory_space<vmem>>, vector<2x4xf32>,
    return
  }
  func.func @transform_0(%arg0: i32) -> (i32, i32) {
    %c0_i32 = arith.constant 0 : i32
    %c0_i32_0 = arith.constant 0 : i32
    return %arg0, %c0_i32 : i32, i32
  }
  func.func @transform_1(%arg0: i32) -> (i32, i32) {
    %c0_i32 = arith.constant 0 : i32
    %c0_i32_0 = arith.constant 0 : i32
    return %arg0, %c0_i32 : i32, i32
  }
  func.func @transform_2(%arg0: i32) -> (i32, i32) {
    %c0_i32 = arith.constant 0 : i32
    %c0_i32_0 = arith.constant 0 : i32
    %c0_i32_1 = arith.constant 0 : i32
    return %c0_i32, %c0_i32_0 : i32, i32
  }
  func.func @transform_3(%arg0: i32) -> (i32, i32) {
    %c0_i32 = arith.constant 0 : i32
    %c0_i32_0 = arith.constant 0 : i32
    %c0_i32_1 = arith.constant 0 : i32
    return %c0_i32, %c0_i32_0 : i32, i32
  }
  func.func @transform_4(%arg0: i32) -> (i32, i32) {
    %c0_i32 = arith.constant 0 : i32
    %c0_i32_0 = arith.constant 0 : i32
    return %arg0, %c0_i32 : i32, i32
  }
}

</mosaic_0001>

<llo_original>
// kernel: discriminator_forward.1
$region0: #{discriminator_forward.1}
  #allocation0 [shape = 'u32[]', space=smem, size = 0x4, offset = 0x4, fixed_abs, tag = 'smem constant byte address 0x4 - core index']
  #allocation1 [shape = 'u32[144,128]{1,0:T(1,128)}', space=vmem, size = 0x12000, scoped, tag = 'internal scratch']
  %s0 = inlined_call_operand.vmem [shape: f32[2,128], index: 0, kind: input, shape index: {}]
  %s1 = inlined_call_operand.vmem [shape: f32[2,128], index: 1, kind: input, shape index: {}]
  %s2 = inlined_call_operand.vmem [shape: f32[128,128], index: 2, kind: input, shape index: {}]
  %s3 = inlined_call_operand.vmem [shape: f32[128,4], index: 3, kind: input, shape index: {}]
  %s4 = inlined_call_operand.vmem [shape: f32[2,4], index: 4, kind: output, shape index: {}]
  %s5 = sld [smem:[#allocation0]]
  $region26: #{discriminator_forward.1} parent=0
    _
  %s7 = ssub.s32 1, %s5
  %s8 = scalar_select 0, %s7, %s5
  // Predicated region
  $region2: #{discriminator_forward.1} parent=0 // pred_check
    _
  $region3: #{discriminator_forward.1} parent=0 // pred_check_branch
    %10 = sbr.rel (0) target = $region5
  $region4: #{discriminator_forward.1} parent=0 // pred_region
    _
  $region5: #{discriminator_forward.1} parent=0 // pred_fallthru
    _
  // Predicated region
  $region6: #{discriminator_forward.1} parent=0 // pred_check
    _
  $region7: #{discriminator_forward.1} parent=0 // pred_check_branch
    %12 = sbr.rel (0) target = $region9
  $region8: #{discriminator_forward.1} parent=0 // pred_region
    _
  $region9: #{discriminator_forward.1} parent=0 // pred_fallthru
    _
  // Predicated region
  $region10: #{discriminator_forward.1} parent=0 // pred_check
    _
  $region11: #{discriminator_forward.1} parent=0 // pred_check_branch
    %14 = sbr.rel (0) target = $region13
  $region12: #{discriminator_forward.1} parent=0 // pred_region
    _
  $region13: #{discriminator_forward.1} parent=0 // pred_fallthru
    _
  // Predicated region
  $region14: #{discriminator_forward.1} parent=0 // pred_check
    _
  $region15: #{discriminator_forward.1} parent=0 // pred_check_branch
    %16 = sbr.rel (0) target = $region17
  $region16: #{discriminator_forward.1} parent=0 // pred_region
    _
  $region17: #{discriminator_forward.1} parent=0 // pred_fallthru
    _
  %v17 = vld [vmem:[%s1] sm:$0x3]
  %v18 = vld [vmem:[%s2] sm:$0xff]
  %v19 = vld [vmem:[%s2 + $0x8] sm:$0xff]
  %v20 = vld [vmem:[%s2 + $0x10] sm:$0xff]
  %v21 = vld [vmem:[%s2 + $0x18] sm:$0xff]
  %v22 = vld [vmem:[%s2 + $0x20] sm:$0xff]
  %v23 = vld [vmem:[%s2 + $0x28] sm:$0xff]
  %v24 = vld [vmem:[%s2 + $0x30] sm:$0xff]
  %v25 = vld [vmem:[%s2 + $0x38] sm:$0xff]
  %v26 = vld [vmem:[%s2 + $0x40] sm:$0xff]
  %v27 = vld [vmem:[%s2 + $0x48] sm:$0xff]
  %v28 = vld [vmem:[%s2 + $0x50] sm:$0xff]
  %v29 = vld [vmem:[%s2 + $0x58] sm:$0xff]
  %v30 = vld [vmem:[%s2 + $0x60] sm:$0xff]
  %v31 = vld [vmem:[%s2 + $0x68] sm:$0xff]
  %v32 = vld [vmem:[%s2 + $0x70] sm:$0xff]
  %v33 = vld [vmem:[%s2 + $0x78] sm:$0xff]
  %34 = vmatprep.subr.mxu0 0.0
  %35 = vmatpush1.msra.mxu0 %v18
  %36 = vmatprep.subr.mxu0 0.0
  %37 = vmatpush1.msra.mxu0 %v19
  %38 = vmatprep.subr.mxu0 0.0
  %39 = vmatpush1.msra.mxu0 %v20
  %40 = vmatprep.subr.mxu0 0.0
  %41 = vmatpush1.msra.mxu0 %v21
  %42 = vmatprep.subr.mxu0 0.0
  %43 = vmatpush1.msra.mxu0 %v22
  %44 = vmatprep.subr.mxu0 0.0
  %45 = vmatpush1.msra.mxu0 %v23
  %46 = vmatprep.subr.mxu0 0.0
  %47 = vmatpush1.msra.mxu0 %v24
  %48 = vmatprep.subr.mxu0 0.0
  %49 = vmatpush1.msra.mxu0 %v25
  %50 = vmatprep.subr.mxu0 0.0
  %51 = vmatpush1.msra.mxu0 %v26
  %52 = vmatprep.subr.mxu0 0.0
  %53 = vmatpush1.msra.mxu0 %v27
  %54 = vmatprep.subr.mxu0 0.0
  %55 = vmatpush1.msra.mxu0 %v28
  %56 = vmatprep.subr.mxu0 0.0
  %57 = vmatpush1.msra.mxu0 %v29
  %58 = vmatprep.subr.mxu0 0.0
  %59 = vmatpush1.msra.mxu0 %v30
  %60 = vmatprep.subr.mxu0 0.0
  %61 = vmatpush1.msra.mxu0 %v31
  %62 = vmatprep.subr.mxu0 0.0
  %63 = vmatpush1.msra.mxu0 %v32
  %64 = vmatprep.subr.mxu0 0.0
  %65 = vmatpush1.msra.mxu0 %v33
  %66 = vmatprep.subr.mxu0 0.0
  %67 = vmatpush1.msra.mxu0 0.0
  %68 = vmatprep.subr.mxu0 0.0
  %69 = vmatpush1.msra.mxu0 0.0
  %70 = vmatprep.subr.mxu0 0.0
  %71 = vmatpush1.msra.mxu0 0.0
  %72 = vmatprep.subr.mxu0 0.0
  %73 = vmatpush1.msra.mxu0 0.0
  %74 = vmatprep.subr.mxu0 0.0
  %75 = vmatpush1.msra.mxu0 0.0
  %76 = vmatprep.subr.mxu0 0.0
  %77 = vmatpush1.msra.mxu0 0.0
  %78 = vmatprep.subr.mxu0 0.0
  %79 = vmatpush1.msra.mxu0 0.0
  %80 = vmatprep.subr.mxu0 0.0
  %81 = vmatpush1.msra.mxu0 0.0
  %82 = vmatprep.subr.mxu0 0.0
  %83 = vmatpush1.msra.mxu0 0.0
  %84 = vmatprep.subr.mxu0 0.0
  %85 = vmatpush1.msra.mxu0 0.0
  %86 = vmatprep.subr.mxu0 0.0
  %87 = vmatpush1.msra.mxu0 0.0
  %88 = vmatprep.subr.mxu0 0.0
  %89 = vmatpush1.msra.mxu0 0.0
  %90 = vmatprep.subr.mxu0 0.0
  %91 = vmatpush1.msra.mxu0 0.0
  %92 = vmatprep.subr.mxu0 0.0
  %93 = vmatpush1.msra.mxu0 0.0
  %94 = vmatprep.subr.mxu0 0.0
  %95 = vmatpush1.msra.mxu0 0.0
  %96 = vmatprep.subr.mxu0 0.0
  %97 = vmatpush1.msra.mxu0 0.0
  %98 = vmatprep.mubr.f32.mxu0 0.0
  %99 = vmatmul.mubr.f32.gmra.mrb[0].mxu0 %v17
  %v100 = vpop.f32.mrb[0].mxu0
  %v101 = vadd.f32 0.0, %v100
  %v102 = vpop.f32.mrb[0].mxu0
  %103 = vdwg.mxu0
  %v104 = vld [vmem:[%s0] sm:$0x3]
  %v105 = vmul.f32 %v104, %v101
  %v106 = vld [vmem:[%s3] sm:$0xff]
  %v107 = vld [vmem:[%s3 + $0x8] sm:$0xff]
  %v108 = vld [vmem:[%s3 + $0x10] sm:$0xff]
  %v109 = vld [vmem:[%s3 + $0x18] sm:$0xff]
  %v110 = vld [vmem:[%s3 + $0x20] sm:$0xff]
  %v111 = vld [vmem:[%s3 + $0x28] sm:$0xff]
  %v112 = vld [vmem:[%s3 + $0x30] sm:$0xff]
  %v113 = vld [vmem:[%s3 + $0x38] sm:$0xff]
  %v114 = vld [vmem:[%s3 + $0x40] sm:$0xff]
  %v115 = vld [vmem:[%s3 + $0x48] sm:$0xff]
  %v116 = vld [vmem:[%s3 + $0x50] sm:$0xff]
  %v117 = vld [vmem:[%s3 + $0x58] sm:$0xff]
  %v118 = vld [vmem:[%s3 + $0x60] sm:$0xff]
  %v119 = vld [vmem:[%s3 + $0x68] sm:$0xff]
  %v120 = vld [vmem:[%s3 + $0x70] sm:$0xff]
  %v121 = vld [vmem:[%s3 + $0x78] sm:$0xff]
  %122 = vmatprep.subr.mxu0 0.0
  %123 = vmatpush1.msra.mxu0 %v106
  %124 = vmatprep.subr.mxu0 0.0
  %125 = vmatpush1.msra.mxu0 %v107
  %126 = vmatprep.subr.mxu0 0.0
  %127 = vmatpush1.msra.mxu0 %v108
  %128 = vmatprep.subr.mxu0 0.0
  %129 = vmatpush1.msra.mxu0 %v109
  %130 = vmatprep.subr.mxu0 0.0
  %131 = vmatpush1.msra.mxu0 %v110
  %132 = vmatprep.subr.mxu0 0.0
  %133 = vmatpush1.msra.mxu0 %v111
  %134 = vmatprep.subr.mxu0 0.0
  %135 = vmatpush1.msra.mxu0 %v112
  %136 = vmatprep.subr.mxu0 0.0
  %137 = vmatpush1.msra.mxu0 %v113
  %138 = vmatprep.subr.mxu0 0.0
  %139 = vmatpush1.msra.mxu0 %v114
  %140 = vmatprep.subr.mxu0 0.0
  %141 = vmatpush1.msra.mxu0 %v115
  %142 = vmatprep.subr.mxu0 0.0
  %143 = vmatpush1.msra.mxu0 %v116
  %144 = vmatprep.subr.mxu0 0.0
  %145 = vmatpush1.msra.mxu0 %v117
  %146 = vmatprep.subr.mxu0 0.0
  %147 = vmatpush1.msra.mxu0 %v118
  %148 = vmatprep.subr.mxu0 0.0
  %149 = vmatpush1.msra.mxu0 %v119
  %150 = vmatprep.subr.mxu0 0.0
  %151 = vmatpush1.msra.mxu0 %v120
  %152 = vmatprep.subr.mxu0 0.0
  %153 = vmatpush1.msra.mxu0 %v121
  %154 = vmatprep.subr.mxu0 0.0
  %155 = vmatpush1.msra.mxu0 0.0
  %156 = vmatprep.subr.mxu0 0.0
  %157 = vmatpush1.msra.mxu0 0.0
  %158 = vmatprep.subr.mxu0 0.0
  %159 = vmatpush1.msra.mxu0 0.0
  %160 = vmatprep.subr.mxu0 0.0
  %161 = vmatpush1.msra.mxu0 0.0
  %162 = vmatprep.subr.mxu0 0.0
  %163 = vmatpush1.msra.mxu0 0.0
  %164 = vmatprep.subr.mxu0 0.0
  %165 = vmatpush1.msra.mxu0 0.0
  %166 = vmatprep.subr.mxu0 0.0
  %167 = vmatpush1.msra.mxu0 0.0
  %168 = vmatprep.subr.mxu0 0.0
  %169 = vmatpush1.msra.mxu0 0.0
  %170 = vmatprep.subr.mxu0 0.0
  %171 = vmatpush1.msra.mxu0 0.0
  %172 = vmatprep.subr.mxu0 0.0
  %173 = vmatpush1.msra.mxu0 0.0
  %174 = vmatprep.subr.mxu0 0.0
  %175 = vmatpush1.msra.mxu0 0.0
  %176 = vmatprep.subr.mxu0 0.0
  %177 = vmatpush1.msra.mxu0 0.0
  %178 = vmatprep.subr.mxu0 0.0
  %179 = vmatpush1.msra.mxu0 0.0
  %180 = vmatprep.subr.mxu0 0.0
  %181 = vmatpush1.msra.mxu0 0.0
  %182 = vmatprep.subr.mxu0 0.0
  %183 = vmatpush1.msra.mxu0 0.0
  %184 = vmatprep.subr.mxu0 0.0
  %185 = vmatpush1.msra.mxu0 0.0
  %186 = vmatprep.mubr.f32.mxu0 0.0
  %187 = vmatmul.mubr.f32.gmra.mrb[0].mxu0 %v105
  %v188 = vpop.f32.mrb[0].mxu0
  %v189 = vadd.f32 0.0, %v188
  %v190 = vpop.f32.mrb[0].mxu0
  %191 = vdwg.mxu0
  %vm192 = vcmask 25600
  %193 = vst.msk [vmem:[%s4] sm:$0x3] %vm192, %v189
  // Predicated region
  $region18: #{discriminator_forward.1} parent=0 // pred_check
    _
  $region19: #{discriminator_forward.1} parent=0 // pred_check_branch
    %195 = sbr.rel (0) target = $region21
  $region20: #{discriminator_forward.1} parent=0 // pred_region
    _
  $region21: #{discriminator_forward.1} parent=0 // pred_fallthru
    _
  // Predicated region
  $region22: #{discriminator_forward.1} parent=0 // pred_check
    _
  $region23: #{discriminator_forward.1} parent=0 // pred_check_branch
    %197 = sbr.rel (0) target = $region25
  $region24: #{discriminator_forward.1} parent=0 // pred_region
    _
  $region25: #{discriminator_forward.1} parent=0 // pred_fallthru
    _

</llo_original>
